<compile_context>
chip_gen: v5e
topology: v5e:2x2
jax: 0.10.0
libtpu: 0.0.40
codegen_flags: <defaults>
</compile_context>

<pallas_src>
import jax
import jax.numpy as jnp
from jax.experimental import pallas as pl
from jax.experimental.pallas import tpu as pltpu

_LANES = 128


def _chip_config():
    """Return (target_tile_bytes, num_tensorcores) for the local TPU."""
    kind = ""
    try:
        kind = jax.devices()[0].device_kind.lower()
    except Exception:  # pragma: no cover - conservative fallback
        pass
    if "7" in kind:                       # v7x: 2 TCs, 64 MiB VMEM, 3.2 TB/s
        return 8 << 20, 2
    if "v5e" in kind or "v5 lite" in kind or "v5lite" in kind:
        return 2 << 20, 1                 # v5e: 16 MiB scoped-VMEM default
    return 4 << 20, 1                     # v6e and unknown chips


def _sigmoid_kernel(x_ref, o_ref):
    # f32 opmath regardless of storage dtype (torch parity for half dtypes;
    # avoids bf16 VPU/EUP fallback paths on v5e).  Strictly elementwise.
    x = x_ref[...].astype(jnp.float32)
    o_ref[...] = (1.0 / (1.0 + jnp.exp(-x))).astype(o_ref.dtype)


def _sigmoid_2d(x2d: jax.Array, tr: int, vmem_limit_bytes: int) -> jax.Array:
    rows, lanes = x2d.shape
    n = rows * lanes
    itemsize = jnp.dtype(x2d.dtype).itemsize
    return pl.pallas_call(
        _sigmoid_kernel,
        out_shape=jax.ShapeDtypeStruct((rows, lanes), x2d.dtype),
        grid_spec=pl.GridSpec(
            grid=(pl.cdiv(rows, tr),),
            in_specs=[pl.BlockSpec((tr, lanes), lambda i: (i, 0))],
            out_specs=pl.BlockSpec((tr, lanes), lambda i: (i, 0)),
        ),
        compiler_params=pltpu.CompilerParams(
            dimension_semantics=("parallel",),
            vmem_limit_bytes=vmem_limit_bytes,
        ),
        cost_estimate=pl.CostEstimate(
            flops=4 * n,
            transcendentals=n,
            bytes_accessed=2 * n * itemsize,
        ),
    )(x2d)


def sigmoid(x: jax.Array) -> jax.Array:
    """Elementwise sigmoid via a Pallas TPU kernel. Matches torch forward."""
    orig_shape = x.shape
    n = x.size
    if n == 0:
        return x

    itemsize = jnp.dtype(x.dtype).itemsize
    # Sublane multiple for full-width packed stores: 8 f32, 16 bf16/f16, 32 i8.
    sub_mult = max(8, 32 // max(int(itemsize), 1))
    tile_bytes, n_cores = _chip_config()

    flat = x.reshape(-1)
    padded = (n % _LANES) != 0
    if padded:
        # Truly ragged lane count (rare): pad to the next 128-lane boundary
        # and slice the tail back off afterwards.
        n_pad = ((n + _LANES - 1) // _LANES) * _LANES
        flat = jnp.pad(flat, (0, n_pad - n))
    else:
        n_pad = n

    rows = n_pad // _LANES

    # Row tile from the generation-specific byte budget, rounded to sublanes.
    tr = max((tile_bytes // (_LANES * itemsize)) // sub_mult * sub_mult,
             sub_mult)
    if n_cores >= 2 and rows >= 2 * sub_mult:
        # Keep >= 2 grid steps so both v7x TensorCores stream HBM.
        half = -(-rows // 2)
        half = ((half + sub_mult - 1) // sub_mult) * sub_mult
        tr = min(tr, half)
    if tr >= rows:
        tr = rows  # single block == full array dims (always a legal block)

    # In + out tiles, double-buffered -> 4x tile bytes, plus headroom.
    # Cap at 48 MiB (fits v7x's 64 MiB physical VMEM with margin).
    vmem_limit = min(max(4 * tr * _LANES * itemsize + (8 << 20), 16 << 20),
                     48 << 20)

    out2d = _sigmoid_2d(flat.reshape(rows, _LANES), tr, vmem_limit)

    out_flat = out2d.reshape(-1)
    if padded:
        out_flat = out_flat[:n]
    return out_flat.reshape(orig_shape)


if __name__ == "__main__":
    key = jax.random.PRNGKey(0)
    # Small NCHW-style input, consistent with a typical activation layer.
    x = jax.random.normal(key, (2, 4, 16, 16), dtype=jnp.float32)

    y = sigmoid(x)
    jax.block_until_ready(y)

    # Sanity check against pure-JAX reference.
    y_ref = jax.nn.sigmoid(x)
    assert y.shape == x.shape and y.dtype == x.dtype
    assert jnp.allclose(y, y_ref, atol=1e-6, rtol=1e-6)

    # Ragged (non-128-multiple) shape exercises the pad path.
    x2 = jax.random.normal(jax.random.PRNGKey(1), (3, 5, 7), dtype=jnp.float32)
    assert jnp.allclose(sigmoid(x2), jax.nn.sigmoid(x2), atol=1e-6, rtol=1e-6)

    # 128-aligned but not 1024-aligned shape exercises the no-pad ragged-rows path.
    x3 = jax.random.normal(jax.random.PRNGKey(3), (3, 128), dtype=jnp.float32)
    assert jnp.allclose(sigmoid(x3), jax.nn.sigmoid(x3), atol=1e-6, rtol=1e-6)

    # bf16 storage with f32 opmath.
    x4 = jax.random.normal(jax.random.PRNGKey(2), (2, 4, 16, 16),
                           dtype=jnp.bfloat16)
    y4 = sigmoid(x4)
    assert y4.dtype == jnp.bfloat16
    assert jnp.allclose(y4.astype(jnp.float32),
                        jax.nn.sigmoid(x4.astype(jnp.float32)),
                        atol=1e-2, rtol=1e-2)

    print("KERNEL_OK")
</pallas_src>

<mosaic_0001>
module attributes {stable_mosaic.version = 11 : i64} {
  func.func @_sigmoid_kernel(%arg0: i32, %arg1: memref<16x128xf32, #tpu.memory_space<vmem>>, %arg2: memref<16x128xf32, #tpu.memory_space<vmem>>) attributes {dimension_semantics = [#tpu.dimension_semantics<parallel>], iteration_bounds = array<i64: 1>, scalar_prefetch = 0 : i64, scratch_operands = 0 : i64, tpu.core_type = #tpu.core_type<tc>, window_params = [{transform_indices = @transform_0, window_bounds = array<i64: 16, 128>}, {transform_indices = @transform_1, window_bounds = array<i64: 16, 128>}]} {
    %c0 = arith.constant 0 : index
    %c0_0 = arith.constant 0 : index
    %0 = vector.load %arg1[%c0, %c0_0] : memref<16x128xf32, #tpu.memory_space<vmem>>, vector<16x128xf32>
    %cst = arith.constant 0.000000e+00 : f32
    %1 = vector.broadcast %cst : f32 to vector<16x128xf32>
    %2 = arith.subf %1, %0 : vector<16x128xf32>
    %3 = math.exp %2 : vector<16x128xf32>
    %cst_1 = arith.constant 1.000000e+00 : f32
    %4 = vector.broadcast %cst_1 : f32 to vector<16x128xf32>
    %5 = arith.addf %4, %3 : vector<16x128xf32>
    %cst_2 = arith.constant 1.000000e+00 : f32
    %6 = vector.broadcast %cst_2 : f32 to vector<16x128xf32>
    %7 = arith.divf %6, %5 : vector<16x128xf32>
    %c0_3 = arith.constant 0 : index
    %c0_4 = arith.constant 0 : index
    %8 = vector.load %arg2[%c0_3, %c0_4] : memref<16x128xf32, #tpu.memory_space<vmem>>, vector<16x128xf32>
    tpu.vector_store %arg2[%c0_3, %c0_4], %7 {strides = array<i32>} : memref<16x128xf32, #tpu.memory_space<vmem>>, vector<16x128xf32>,
    return
  }
  func.func @transform_0(%arg0: i32) -> (i32, i32) {
    %c0_i32 = arith.constant 0 : i32
    %c0_i32_0 = arith.constant 0 : i32
    return %arg0, %c0_i32 : i32, i32
  }
  func.func @transform_1(%arg0: i32) -> (i32, i32) {
    %c0_i32 = arith.constant 0 : i32
    %c0_i32_0 = arith.constant 0 : i32
    return %arg0, %c0_i32 : i32, i32
  }
}

</mosaic_0001>

<llo_original>
// kernel: tpu_custom_call.1
$region0: #{tpu_custom_call.1}
  #allocation0 [shape = 'u32[]', space=smem, size = 0x4, offset = 0x4, fixed_abs, tag = 'smem constant byte address 0x4 - core index']
  #allocation1 [shape = 'u32[72,128]{1,0:T(1,128)}', space=vmem, size = 0x9000, scoped, tag = 'internal scratch']
  %s0 = inlined_call_operand.hbm [shape: f32[16,128], index: 0, kind: input, shape index: {}]
  %s1 = inlined_call_operand.hbm [shape: f32[16,128], index: 1, kind: output, shape index: {}]
  %s2 = sld [smem:[#allocation0]]
  $region18: #{tpu_custom_call.1} parent=0
    _
  %s4 = ssub.s32 1, %s2
  %s5 = scalar_select 0, %s4, %s2
  $region1: #{tpu_custom_call.1} parent=0
    #allocation2 [shape = 'u8[8192]{0}', space=vmem, size = 0x2000, scoped, tag = 'input window, operand 0, single buffered']
    #allocation3 [shape = 's32[1]{0}', space=sflag, size = 0x4, scoped, tag = 'scoped memory for tpu_custom_call.1']
    #allocation4 [shape = 's32[1]{0}', space=sflag, size = 0x4, scoped, tag = 'scoped memory for tpu_custom_call.1']
    #allocation5 [shape = 'u8[8192]{0}', space=vmem, size = 0x2000, scoped, tag = 'output window, operand 0, single buffered']
    %6 = vsyncpa [#allocation3], 0
    %7 = vsyncpa [#allocation4], 0
    // Predicated region
    $region2: #{tpu_custom_call.1} parent=1 // pred_check
      _
    $region3: #{tpu_custom_call.1} parent=1 // pred_check_branch
      %9 = sbr.rel (0) target = $region5
    $region4: #{tpu_custom_call.1} parent=1 // pred_region
      %11 = vsyncadd [#allocation3], 0
      %s12 = sshll.u32 %s0, 4
      %s13 = int_to_ptr.hbm [resolvable:$true] %s12
      %s14 = sshll.u32 [#allocation2], 4
      %s15 = int_to_ptr.vmem [resolvable:$true] %s14
      %20 = dma.hbm_to_vmem [thread:$0]  %s13, 256, %s15, [#allocation3], 128, 128, 8
    $region5: #{tpu_custom_call.1} parent=1 // pred_fallthru
      _
    // Predicated region
    $region6: #{tpu_custom_call.1} parent=1 // pred_check
      _
    $region7: #{tpu_custom_call.1} parent=1 // pred_check_branch
      %22 = sbr.rel (0) target = $region9
    $region8: #{tpu_custom_call.1} parent=1 // pred_region
      %24 = dma.done [#allocation3], 256
    $region9: #{tpu_custom_call.1} parent=1 // pred_fallthru
      _
    %v25 = vld [vmem:[#allocation2] sm:$0xff]
    %v26 = vld [vmem:[#allocation2 + $0x8] sm:$0xff]
    %v27 = vsub.f32 0.0, %v25
    %v28 = vsub.f32 0.0, %v26
    %v29 = vmul.f32 %v27, 1.442695
    %v30 = vpow.pop %v29
    %v31 = vmul.f32 %v28, 1.442695
    %v32 = vpow.pop %v31
    %v33 = vadd.f32 %v30, 1.0
    %v34 = vadd.f32 %v32, 1.0
    %v35 = vrcp.pop %v33
    %v36 = vmul.f32 %v33, %v35
    %v37 = vsub.f32 1.0, %v36
    %v38 = vmul.f32 %v35, %v37
    %v39 = vadd.f32 %v35, %v38
    %vm40 = vweird.f32 %v33
    %vm41 = vweird.f32 %v35
    %vm42 = vmor %vm40, %vm41
    %v43 = vsel %vm42, %v35, %v39
    %v44 = vand.u32 2147483647, %v33
    %vm45 = vcmp.eq.f32.partialorder %v44, 8.507059e+37
    %v46 = vand.u32 %v33, 2147483648
    %v47 = vor.u32 1.1754944e-38, %v46
    %v48 = vsel %vm45, %v47, %v43
    %v49 = vmul.f32 1.0, %v48
    %v50 = vrcp.pop %v34
    %v51 = vmul.f32 %v34, %v50
    %v52 = vsub.f32 1.0, %v51
    %v53 = vmul.f32 %v50, %v52
    %v54 = vadd.f32 %v50, %v53
    %vm55 = vweird.f32 %v34
    %vm56 = vweird.f32 %v50
    %vm57 = vmor %vm55, %vm56
    %v58 = vsel %vm57, %v50, %v54
    %v59 = vand.u32 2147483647, %v34
    %vm60 = vcmp.eq.f32.partialorder %v59, 8.507059e+37
    %v61 = vand.u32 %v34, 2147483648
    %v62 = vor.u32 1.1754944e-38, %v61
    %v63 = vsel %vm60, %v62, %v58
    %v64 = vmul.f32 1.0, %v63
    %65 = vst [vmem:[#allocation5] sm:$0xff] %v49
    %66 = vst [vmem:[#allocation5 + $0x8] sm:$0xff] %v64
    // Predicated region
    $region10: #{tpu_custom_call.1} parent=1 // pred_check
      _
    $region11: #{tpu_custom_call.1} parent=1 // pred_check_branch
      %68 = sbr.rel (0) target = $region13
    $region12: #{tpu_custom_call.1} parent=1 // pred_region
      %70 = vsyncadd [#allocation4], 0
      %s71 = sshll.u32 [#allocation5], 4
      %s72 = int_to_ptr.vmem [resolvable:$true] %s71
      %s73 = sshll.u32 %s1, 4
      %s74 = int_to_ptr.hbm [resolvable:$true] %s73
      %79 = dma.vmem_to_hbm [thread:$0]  %s72, 256, %s74, [#allocation4], 128, 128, 8
    $region13: #{tpu_custom_call.1} parent=1 // pred_fallthru
      _
    // Predicated region
    $region14: #{tpu_custom_call.1} parent=1 // pred_check
      _
    $region15: #{tpu_custom_call.1} parent=1 // pred_check_branch
      %81 = sbr.rel (0) target = $region17
    $region16: #{tpu_custom_call.1} parent=1 // pred_region
      %83 = dma.done [#allocation4], 256
    $region17: #{tpu_custom_call.1} parent=1 // pred_fallthru
      _
    %84 = vsyncpa [#allocation3], 1
    %85 = vsyncpa [#allocation4], 1

</llo_original>
